<compile_context>
chip_gen: v5e
topology: v5e:2x2
jax: 0.10.0
libtpu: 0.0.40
codegen_flags: <defaults>
</compile_context>

<pallas_src>
import jax
import jax.numpy as jnp
from jax.experimental import pallas as pl
from jax.experimental.pallas import tpu as pltpu


def _round_up(x: int, m: int) -> int:
    return ((x + m - 1) // m) * m


def _vmem_capacity_bytes(default: int = 64 * 1024 * 1024) -> int:
    """Query per-core VMEM capacity; fall back to the smallest (v7x) size."""
    try:
        cap = getattr(pltpu.get_tpu_info(), "vmem_capacity_bytes", None)
        if cap:
            return int(cap)
    except Exception:
        pass
    return default


def _derive_tiles(B, S, H, L_pad, vmem_cap, tb, ts):
    """Pick (tb, ts) that are legal for the (8,128) tiling rules and fit VMEM."""
    # Batch tile: big enough to feed the MXU in the epilogue GEMMs.
    if tb is None:
        tb = min(64, B)
    if tb < B:
        tb = max(8, (tb // 8) * 8)   # multiple of 8 -> legal out-block sublane dim
    else:
        tb = B                       # single batch tile (block == full dim)

    if ts is None:
        # Largest sequence tile whose double-buffered bf16 stream (+ mask,
        # weights, accumulators, per-chunk f32 temp) fits ~55% of VMEM.
        weight_bytes = 2 * (H * H * 2 + H * 4 + H * L_pad * 2 + L_pad * 4)
        acc_bytes = tb * H * 4 + tb * 4 + 2 * tb * L_pad * 4
        chunk_tmp = 1024 * H * 4                     # bounded f32 reduce temp
        budget = int(vmem_cap * 0.55) - weight_bytes - acc_bytes - chunk_tmp
        per_ts = 2 * tb * (H * 2 + 4)                # dbl-buffered emb + mask
        ts = max(8, budget // per_ts) if per_ts > 0 else 8
        ts = min(ts, 512)
    if ts >= S:
        ts = S                       # single seq tile (block == full dim)
    else:
        ts = max(8, (ts // 8) * 8)   # multiple of 8; ragged tail masked in-kernel
    return int(tb), int(ts)


def _head_kernel(emb_ref, mask_ref, wp_ref, bp_ref, wc_ref, bc_ref, out_ref,
                 sum_acc, cnt_acc):
    """Tiled masked mean-pool -> pooler dense+tanh -> classifier -> sigmoid.

    Grid: (batch_tiles, seq_tiles); the sequence axis is the reduction
    ("arbitrary").  sum_acc: VMEM [TB, H] f32 running masked sum; cnt_acc:
    VMEM [TB, 1] f32 running mask count.
    """
    s = pl.program_id(1)

    @pl.when(s == 0)
    def _init():
        sum_acc[...] = jnp.zeros_like(sum_acc)
        cnt_acc[...] = jnp.zeros_like(cnt_acc)

    tb, ts, _ = emb_ref.shape
    # Chunk the TS reduction so the widened-f32 temporary stays small
    # (bounds VMEM/vreg pressure when tiles are maxed on the 64 MiB v7x part).
    sub = max(8, min(ts, ((1024 // tb) // 8) * 8))

    part_sum = None
    part_cnt = None
    for c0 in range(0, ts, sub):
        cw = min(sub, ts - c0)
        m = mask_ref[:, c0:c0 + cw, :]                      # [tb, cw, 1] f32
        e = emb_ref[:, c0:c0 + cw, :]                       # [tb, cw, H] bf16
        # The mask is padded in HBM, so m == 0 exactly where a ragged emb
        # block may contain garbage (possibly NaN/Inf); zero emb there
        # explicitly instead of relying on garbage * 0.
        e = jnp.where(m > 0.0, e, jnp.zeros((), e.dtype))
        prod = e * m.astype(e.dtype)                        # bf16 mul, lane splat
        ps = jnp.sum(prod.astype(jnp.float32), axis=1)      # [tb, H] f32
        pc = jnp.sum(m, axis=1)                             # [tb, 1] f32
        part_sum = ps if part_sum is None else part_sum + ps
        part_cnt = pc if part_cnt is None else part_cnt + pc
    sum_acc[...] += part_sum
    cnt_acc[...] += part_cnt

    @pl.when(s == pl.num_programs(1) - 1)
    def _epilogue():
        denom = jnp.maximum(cnt_acc[...], 1.0)
        pooled = sum_acc[...] * pl.reciprocal(denom)        # exact; [tb, H] f32

        # BERT-style pooler: Dense(H, H) + tanh  ->  pooler_output.
        pooler = jnp.tanh(
            jnp.dot(pooled.astype(jnp.bfloat16), wp_ref[...],
                    preferred_element_type=jnp.float32)
            + bp_ref[...]
        )                                                   # [tb, H] f32

        # Dropout(0.3) is identity in eval mode.
        # TODO(synk): training-mode dropout would need pltpu.prng_random_bits.

        # Classifier: Linear(H, L_pad) + sigmoid (lane-padded to 128).
        logits = (
            jnp.dot(pooler.astype(jnp.bfloat16), wc_ref[...],
                    preferred_element_type=jnp.float32)
            + bc_ref[...]
        )                                                   # [tb, L_pad]
        out_ref[...] = jax.nn.sigmoid(logits)


def cultural_pattern_classifier_forward(input_ids, attention_mask, params,
                                        *, tb=None, ts=None):
    """Full forward: bf16 embedding gather (glue) + tiled Pallas head kernel."""
    emb_table = params["emb_table"]                  # [V, H] bf16
    w_pool = params["w_pool"].astype(jnp.bfloat16)   # [H, H]
    b_pool = params["b_pool"].astype(jnp.float32)    # [1, H]
    w_cls = params["w_cls"]                          # [H, L]
    b_cls = params["b_cls"]                          # [1, L]

    B, S = input_ids.shape
    H = emb_table.shape[1]
    L = w_cls.shape[1]
    L_pad = _round_up(L, 128)    # lane-dense output + dense MXU classifier tiles

    vmem_cap = _vmem_capacity_bytes()
    tb, ts = _derive_tiles(B, S, H, L_pad, vmem_cap, tb, ts)

    n_b = pl.cdiv(B, tb)
    n_s = pl.cdiv(S, ts)
    B_out = n_b * tb
    S_pad = n_s * ts

    # Glue: bf16 embedding gather.  The dominant [B,S,H] tensor is NOT padded
    # or copied again -- ragged edge tiles are masked inside the kernel.
    emb = jnp.take(emb_table, input_ids, axis=0)                    # [B,S,H] bf16

    # Mask is tiny -> pad it (so every position the kernel reads has a defined
    # 0/1 value) and lay it out as [B, S, 1] so TS sits on the sublane axis.
    mask = attention_mask.astype(jnp.float32)[:, :, None]           # [B,S,1]
    mask = jnp.pad(mask, ((0, B_out - B), (0, S_pad - S), (0, 0)))

    w_cls_p = jnp.pad(w_cls, ((0, 0), (0, L_pad - L))).astype(jnp.bfloat16)
    b_cls_p = jnp.pad(b_cls, ((0, 0), (0, L_pad - L))).astype(jnp.float32)

    grid = (n_b, n_s)

    out = pl.pallas_call(
        _head_kernel,
        out_shape=jax.ShapeDtypeStruct((B_out, L_pad), jnp.float32),
        grid_spec=pltpu.PrefetchScalarGridSpec(
            num_scalar_prefetch=0,
            grid=grid,
            in_specs=[
                pl.BlockSpec((tb, ts, H), lambda b, s: (b, s, 0)),   # emb tile
                pl.BlockSpec((tb, ts, 1), lambda b, s: (b, s, 0)),   # mask tile
                pl.BlockSpec((H, H), lambda b, s: (0, 0)),           # w_pool
                pl.BlockSpec((1, H), lambda b, s: (0, 0)),           # b_pool
                pl.BlockSpec((H, L_pad), lambda b, s: (0, 0)),       # w_cls
                pl.BlockSpec((1, L_pad), lambda b, s: (0, 0)),       # b_cls
            ],
            # Output block is resident across the sequence (reduction) axis.
            out_specs=pl.BlockSpec((tb, L_pad), lambda b, s: (b, 0)),
            scratch_shapes=[
                pltpu.VMEM((tb, H), jnp.float32),   # running masked sum
                pltpu.VMEM((tb, 1), jnp.float32),   # running mask count
            ],
        ),
        compiler_params=pltpu.CompilerParams(
            dimension_semantics=("parallel", "arbitrary"),
            vmem_limit_bytes=int(vmem_cap * 0.9),
        ),
    )(emb, mask, w_pool, b_pool, w_cls_p, b_cls_p)

    return out[:B, :L]


def init_params(key, vocab_size, hidden_size, num_labels):
    k_emb, k_wp, k_bp, k_wc, k_bc = jax.random.split(key, 5)
    return {
        "emb_table": (jax.random.normal(k_emb, (vocab_size, hidden_size),
                                        jnp.float32) * 0.02).astype(jnp.bfloat16),
        "w_pool": jax.random.normal(k_wp, (hidden_size, hidden_size), jnp.float32)
        * (1.0 / hidden_size ** 0.5),
        "b_pool": jax.random.normal(k_bp, (1, hidden_size), jnp.float32) * 0.01,
        "w_cls": jax.random.normal(k_wc, (hidden_size, num_labels), jnp.float32)
        * (1.0 / hidden_size ** 0.5),
        "b_cls": jax.random.normal(k_bc, (1, num_labels), jnp.float32) * 0.01,
    }


def _reference_forward(input_ids, attention_mask, params):
    """Pure-JAX reference with the SAME bf16 weight casts as the kernel."""
    emb = jnp.take(params["emb_table"], input_ids, axis=0).astype(jnp.float32)
    mask = attention_mask.astype(jnp.float32)
    summed = jnp.sum(emb * mask[:, :, None], axis=1)
    denom = jnp.maximum(jnp.sum(mask, axis=1, keepdims=True), 1.0)
    pooled = summed * (1.0 / denom)
    wp = params["w_pool"].astype(jnp.bfloat16)
    wc = params["w_cls"].astype(jnp.bfloat16)
    pooler = jnp.tanh(
        jnp.dot(pooled.astype(jnp.bfloat16), wp,
                preferred_element_type=jnp.float32) + params["b_pool"])
    logits = jnp.dot(pooler.astype(jnp.bfloat16), wc,
                     preferred_element_type=jnp.float32) + params["b_cls"]
    return jax.nn.sigmoid(logits)


if __name__ == "__main__":
    # Small, module-consistent shapes: batch=2, seq=8, hidden=32, num_labels=8.
    B, S, H, L, V = 2, 8, 32, 8, 64

    key = jax.random.PRNGKey(0)
    k_ids, k_params = jax.random.split(key)

    input_ids = jax.random.randint(k_ids, (B, S), 0, V, dtype=jnp.int32)
    # attention_mask: first sequence fully attended, second padded at the tail.
    attention_mask = jnp.array([[1] * S, [1] * (S - 3) + [0] * 3], dtype=jnp.int32)

    params = init_params(k_params, V, H, L)

    probs = cultural_pattern_classifier_forward(input_ids, attention_mask, params)
    probs = jax.block_until_ready(probs)

    assert probs.shape == (B, L)
    assert bool(jnp.all((probs >= 0.0) & (probs <= 1.0)))

    ref = _reference_forward(input_ids, attention_mask, params)
    assert bool(jnp.allclose(probs, ref, atol=5e-3, rtol=5e-3))

    # Ragged-tile path: batch/seq not multiples of the tiles, multi-step
    # sequence reduction (exercises the accumulator + in-kernel edge masking).
    B2, S2 = 10, 13
    k_ids2, k_len2 = jax.random.split(k_ids)
    ids2 = jax.random.randint(k_ids2, (B2, S2), 0, V, dtype=jnp.int32)
    lens = jax.random.randint(k_len2, (B2,), 1, S2 + 1, dtype=jnp.int32)
    mask2 = (jnp.arange(S2)[None, :] < lens[:, None]).astype(jnp.int32)

    probs2 = cultural_pattern_classifier_forward(ids2, mask2, params, tb=8, ts=8)
    probs2 = jax.block_until_ready(probs2)
    ref2 = _reference_forward(ids2, mask2, params)

    assert probs2.shape == (B2, L)
    assert bool(jnp.all((probs2 >= 0.0) & (probs2 <= 1.0)))
    assert bool(jnp.allclose(probs2, ref2, atol=5e-3, rtol=5e-3))

    print("KERNEL_OK")
</pallas_src>

<mosaic_0001>
module attributes {stable_mosaic.version = 11 : i64} {
  func.func @_head_kernel(%arg0: i32, %arg1: i32, %arg2: memref<2x8x32xbf16, #tpu.memory_space<vmem>>, %arg3: memref<2x8x1xf32, #tpu.memory_space<vmem>>, %arg4: memref<32x32xbf16, #tpu.memory_space<vmem>>, %arg5: memref<1x32xf32, #tpu.memory_space<vmem>>, %arg6: memref<32x128xbf16, #tpu.memory_space<vmem>>, %arg7: memref<1x128xf32, #tpu.memory_space<vmem>>, %arg8: memref<2x128xf32, #tpu.memory_space<vmem>>, %arg9: memref<2x32xf32, #tpu.memory_space<vmem>>, %arg10: memref<2x1xf32, #tpu.memory_space<vmem>>) attributes {dimension_semantics = [#tpu.dimension_semantics<parallel>, #tpu.dimension_semantics<arbitrary>], iteration_bounds = array<i64: 1, 1>, scalar_prefetch = 0 : i64, scratch_operands = 2 : i64, tpu.core_type = #tpu.core_type<tc>, window_params = [{transform_indices = @transform_0, window_bounds = array<i64: 2, 8, 32>}, {transform_indices = @transform_1, window_bounds = array<i64: 2, 8, 1>}, {pipeline_mode = #tpu.pipeline_mode<synchronous>, transform_indices = @transform_2, window_bounds = array<i64: 32, 32>}, {pipeline_mode = #tpu.pipeline_mode<synchronous>, transform_indices = @transform_3, window_bounds = array<i64: 1, 32>}, {pipeline_mode = #tpu.pipeline_mode<synchronous>, transform_indices = @transform_4, window_bounds = array<i64: 32, 128>}, {pipeline_mode = #tpu.pipeline_mode<synchronous>, transform_indices = @transform_5, window_bounds = array<i64: 1, 128>}, {transform_indices = @transform_6, window_bounds = array<i64: 2, 128>}]} {
    %c0_i32 = arith.constant 0 : i32
    %0 = arith.cmpi eq, %arg1, %c0_i32 : i32
    %1 = arith.extui %0 : i1 to i32
    %c0_i32_0 = arith.constant 0 : i32
    %2 = arith.cmpi ne, %1, %c0_i32_0 : i32
    scf.if %2 {
      %cst_19 = arith.constant 0.000000e+00 : f32
      %26 = vector.broadcast %cst_19 : f32 to vector<2x32xf32>
      %c0_20 = arith.constant 0 : index
      %c0_21 = arith.constant 0 : index
      %27 = vector.load %arg9[%c0_20, %c0_21] : memref<2x32xf32, #tpu.memory_space<vmem>>, vector<2x32xf32>
      tpu.vector_store %arg9[%c0_20, %c0_21], %26 {strides = array<i32>} : memref<2x32xf32, #tpu.memory_space<vmem>>, vector<2x32xf32>,
      %cst_22 = arith.constant 0.000000e+00 : f32
      %28 = vector.broadcast %cst_22 : f32 to vector<2x1xf32>
      %c0_23 = arith.constant 0 : index
      %c0_24 = arith.constant 0 : index
      %29 = vector.load %arg10[%c0_23, %c0_24] : memref<2x1xf32, #tpu.memory_space<vmem>>, vector<2x1xf32>
      tpu.vector_store %arg10[%c0_23, %c0_24], %28 {strides = array<i32>} : memref<2x1xf32, #tpu.memory_space<vmem>>, vector<2x1xf32>,
    } else {
    }
    %c0 = arith.constant 0 : index
    %c0_1 = arith.constant 0 : index
    %c0_2 = arith.constant 0 : index
    %3 = vector.load %arg3[%c0, %c0_1, %c0_2] : memref<2x8x1xf32, #tpu.memory_space<vmem>>, vector<2x8x1xf32>
    %c0_3 = arith.constant 0 : index
    %c0_4 = arith.constant 0 : index
    %c0_5 = arith.constant 0 : index
    %4 = vector.load %arg2[%c0_3, %c0_4, %c0_5] : memref<2x8x32xbf16, #tpu.memory_space<vmem>>, vector<2x8x32xbf16>
    %cst = arith.constant 0.000000e+00 : f32
    %5 = vector.broadcast %cst : f32 to vector<2x8x1xf32>
    %6 = arith.cmpf ogt, %3, %5 : vector<2x8x1xf32>
    %cst_6 = arith.constant 0.000000e+00 : bf16
    %7 = vector.shape_cast %6 : vector<2x8x1xi1> to vector<2x8x1xi1>
    %8 = vector.broadcast %7 : vector<2x8x1xi1> to vector<2x8x32xi1>
    %9 = vector.broadcast %cst_6 : bf16 to vector<2x8x32xbf16>
    %10 = arith.select %8, %4, %9 : vector<2x8x32xi1>, vector<2x8x32xbf16>
    %11 = arith.truncf %3 : vector<2x8x1xf32> to vector<2x8x1xbf16>
    %12 = vector.broadcast %11 : vector<2x8x1xbf16> to vector<2x8x32xbf16>
    %13 = arith.mulf %10, %12 : vector<2x8x32xbf16>
    %14 = arith.extf %13 : vector<2x8x32xbf16> to vector<2x8x32xf32>
    %cst_7 = arith.constant dense<0.000000e+00> : vector<2x32xf32>
    %15 = vector.multi_reduction <add>, %14, %cst_7 [1] : vector<2x8x32xf32> to vector<2x32xf32>
    %cst_8 = arith.constant dense<0.000000e+00> : vector<2x1xf32>
    %16 = vector.multi_reduction <add>, %3, %cst_8 [1] : vector<2x8x1xf32> to vector<2x1xf32>
    %c0_9 = arith.constant 0 : index
    %c0_10 = arith.constant 0 : index
    %17 = vector.load %arg9[%c0_9, %c0_10] : memref<2x32xf32, #tpu.memory_space<vmem>>, vector<2x32xf32>
    %18 = arith.addf %17, %15 : vector<2x32xf32>
    %c0_11 = arith.constant 0 : index
    %c0_12 = arith.constant 0 : index
    %19 = vector.load %arg9[%c0_11, %c0_12] : memref<2x32xf32, #tpu.memory_space<vmem>>, vector<2x32xf32>
    tpu.vector_store %arg9[%c0_11, %c0_12], %18 {strides = array<i32>} : memref<2x32xf32, #tpu.memory_space<vmem>>, vector<2x32xf32>,
    %c0_13 = arith.constant 0 : index
    %c0_14 = arith.constant 0 : index
    %20 = vector.load %arg10[%c0_13, %c0_14] : memref<2x1xf32, #tpu.memory_space<vmem>>, vector<2x1xf32>
    %21 = arith.addf %20, %16 : vector<2x1xf32>
    %c0_15 = arith.constant 0 : index
    %c0_16 = arith.constant 0 : index
    %22 = vector.load %arg10[%c0_15, %c0_16] : memref<2x1xf32, #tpu.memory_space<vmem>>, vector<2x1xf32>
    tpu.vector_store %arg10[%c0_15, %c0_16], %21 {strides = array<i32>} : memref<2x1xf32, #tpu.memory_space<vmem>>, vector<2x1xf32>,
    %c0_i32_17 = arith.constant 0 : i32
    %23 = arith.cmpi eq, %arg1, %c0_i32_17 : i32
    %24 = arith.extui %23 : i1 to i32
    %c0_i32_18 = arith.constant 0 : i32
    %25 = arith.cmpi ne, %24, %c0_i32_18 : i32
    scf.if %25 {
      %c0_19 = arith.constant 0 : index
      %c0_20 = arith.constant 0 : index
      %26 = vector.load %arg10[%c0_19, %c0_20] : memref<2x1xf32, #tpu.memory_space<vmem>>, vector<2x1xf32>
      %cst_21 = arith.constant 1.000000e+00 : f32
      %27 = vector.broadcast %cst_21 : f32 to vector<2x1xf32>
      %28 = arith.maximumf %26, %27 : vector<2x1xf32>
      %c0_22 = arith.constant 0 : index
      %c0_23 = arith.constant 0 : index
      %29 = vector.load %arg9[%c0_22, %c0_23] : memref<2x32xf32, #tpu.memory_space<vmem>>, vector<2x32xf32>
      %30 = tpu.reciprocal %28 : vector<2x1xf32> -> vector<2x1xf32>
      %31 = vector.broadcast %30 : vector<2x1xf32> to vector<2x32xf32>
      %32 = arith.mulf %29, %31 : vector<2x32xf32>
      %33 = arith.truncf %32 : vector<2x32xf32> to vector<2x32xbf16>
      %c0_24 = arith.constant 0 : index
      %c0_25 = arith.constant 0 : index
      %34 = vector.load %arg4[%c0_24, %c0_25] : memref<32x32xbf16, #tpu.memory_space<vmem>>, vector<32x32xbf16>
      %cst_26 = arith.constant dense<0.000000e+00> : vector<2x32xf32>
      %35 = tpu.matmul %33, %34, %cst_26 {dimension_numbers = #tpu.dot_dimension_numbers<[1], [0], [0], [1], [0, 0, 1, 1], [], []>} : vector<2x32xbf16>, vector<32x32xbf16>, vector<2x32xf32> -> vector<2x32xf32>
      %c0_27 = arith.constant 0 : index
      %c0_28 = arith.constant 0 : index
      %36 = vector.load %arg5[%c0_27, %c0_28] : memref<1x32xf32, #tpu.memory_space<vmem>>, vector<1x32xf32>
      %37 = vector.broadcast %36 : vector<1x32xf32> to vector<2x32xf32>
      %38 = arith.addf %35, %37 : vector<2x32xf32>
      %39 = math.tanh %38 : vector<2x32xf32>
      %40 = arith.truncf %39 : vector<2x32xf32> to vector<2x32xbf16>
      %c0_29 = arith.constant 0 : index
      %c0_30 = arith.constant 0 : index
      %41 = vector.load %arg6[%c0_29, %c0_30] : memref<32x128xbf16, #tpu.memory_space<vmem>>, vector<32x128xbf16>
      %cst_31 = arith.constant dense<0.000000e+00> : vector<2x128xf32>
      %42 = tpu.matmul %40, %41, %cst_31 {dimension_numbers = #tpu.dot_dimension_numbers<[1], [0], [0], [1], [0, 0, 1, 1], [], []>} : vector<2x32xbf16>, vector<32x128xbf16>, vector<2x128xf32> -> vector<2x128xf32>
      %c0_32 = arith.constant 0 : index
      %c0_33 = arith.constant 0 : index
      %43 = vector.load %arg7[%c0_32, %c0_33] : memref<1x128xf32, #tpu.memory_space<vmem>>, vector<1x128xf32>
      %44 = vector.broadcast %43 : vector<1x128xf32> to vector<2x128xf32>
      %45 = arith.addf %42, %44 : vector<2x128xf32>
      %46 = arith.negf %45 : vector<2x128xf32>
      %47 = math.exp %46 : vector<2x128xf32>
      %cst_34 = arith.constant 1.000000e+00 : f32
      %48 = vector.broadcast %cst_34 : f32 to vector<2x128xf32>
      %49 = arith.addf %48, %47 : vector<2x128xf32>
      %50 = arith.divf %48, %49 : vector<2x128xf32>
      %c0_35 = arith.constant 0 : index
      %c0_36 = arith.constant 0 : index
      %51 = vector.load %arg8[%c0_35, %c0_36] : memref<2x128xf32, #tpu.memory_space<vmem>>, vector<2x128xf32>
      tpu.vector_store %arg8[%c0_35, %c0_36], %50 {strides = array<i32>} : memref<2x128xf32, #tpu.memory_space<vmem>>, vector<2x128xf32>,
    } else {
    }
    return
  }
  func.func @transform_0(%arg0: i32, %arg1: i32) -> (i32, i32, i32) {
    %c0_i32 = arith.constant 0 : i32
    %c0_i32_0 = arith.constant 0 : i32
    return %arg0, %arg1, %c0_i32 : i32, i32, i32
  }
  func.func @transform_1(%arg0: i32, %arg1: i32) -> (i32, i32, i32) {
    %c0_i32 = arith.constant 0 : i32
    %c0_i32_0 = arith.constant 0 : i32
    return %arg0, %arg1, %c0_i32 : i32, i32, i32
  }
  func.func @transform_2(%arg0: i32, %arg1: i32) -> (i32, i32) {
    %c0_i32 = arith.constant 0 : i32
    %c0_i32_0 = arith.constant 0 : i32
    %c0_i32_1 = arith.constant 0 : i32
    return %c0_i32, %c0_i32_0 : i32, i32
  }
  func.func @transform_3(%arg0: i32, %arg1: i32) -> (i32, i32) {
    %c0_i32 = arith.constant 0 : i32
    %c0_i32_0 = arith.constant 0 : i32
    %c0_i32_1 = arith.constant 0 : i32
    return %c0_i32, %c0_i32_0 : i32, i32
  }
  func.func @transform_4(%arg0: i32, %arg1: i32) -> (i32, i32) {
    %c0_i32 = arith.constant 0 : i32
    %c0_i32_0 = arith.constant 0 : i32
    %c0_i32_1 = arith.constant 0 : i32
    return %c0_i32, %c0_i32_0 : i32, i32
  }
  func.func @transform_5(%arg0: i32, %arg1: i32) -> (i32, i32) {
    %c0_i32 = arith.constant 0 : i32
    %c0_i32_0 = arith.constant 0 : i32
    %c0_i32_1 = arith.constant 0 : i32
    return %c0_i32, %c0_i32_0 : i32, i32
  }
  func.func @transform_6(%arg0: i32, %arg1: i32) -> (i32, i32) {
    %c0_i32 = arith.constant 0 : i32
    %c0_i32_0 = arith.constant 0 : i32
    return %arg0, %c0_i32 : i32, i32
  }
}

</mosaic_0001>

<llo_original>
// kernel: tpu_custom_call.1
$region0: #{tpu_custom_call.1}
  #allocation0 [shape = 'u32[]', space=smem, size = 0x4, offset = 0x4, fixed_abs, tag = 'smem constant byte address 0x4 - core index']
  #allocation1 [shape = 'u32[72,128]{1,0:T(1,128)}', space=vmem, size = 0x9000, scoped, tag = 'internal scratch']
  #allocation2 [shape = 'f32[2,32]{1,0:T(2,128)}', space=vmem, size = 0x400, scoped, tag = 'scratch operand']
  #allocation3 [shape = 'f32[2,1]{1,0:T(2,128)}', space=vmem, size = 0x400, scoped, tag = 'scratch operand']
  %s0 = inlined_call_operand.hbm [shape: bf16[2,8,32], index: 0, kind: input, shape index: {}]
  %s1 = inlined_call_operand.vmem [shape: f32[2,8,1], index: 1, kind: input, shape index: {}]
  %s2 = inlined_call_operand.vmem [shape: bf16[32,32], index: 2, kind: input, shape index: {}]
  %s3 = inlined_call_operand.vmem [shape: f32[1,32], index: 3, kind: input, shape index: {}]
  %s4 = inlined_call_operand.hbm [shape: bf16[32,128], index: 4, kind: input, shape index: {}]
  %s5 = inlined_call_operand.vmem [shape: f32[1,128], index: 5, kind: input, shape index: {}]
  %s6 = inlined_call_operand.hbm [shape: f32[2,128], index: 6, kind: output, shape index: {}]
  %s7 = sld [smem:[#allocation0]]
  $region50: #{tpu_custom_call.1} parent=0
    _
  %s9 = ssub.s32 1, %s7
  %s10 = scalar_select 0, %s9, %s7
  $region1: #{tpu_custom_call.1} parent=0
    #allocation4 [shape = 'u8[4096]{0}', space=vmem, size = 0x1000, scoped, tag = 'input window, operand 0, single buffered']
    #allocation5 [shape = 's32[1]{0}', space=sflag, size = 0x4, scoped, tag = 'scoped memory for tpu_custom_call.1']
    #allocation6 [shape = 's32[1]{0}', space=sflag, size = 0x4, scoped, tag = 'scoped memory for tpu_custom_call.1']
    #allocation7 [shape = 'u8[8192]{0}', space=vmem, size = 0x2000, scoped, tag = 'input window, operand 4, single buffered']
    #allocation8 [shape = 's32[1]{0}', space=sflag, size = 0x4, scoped, tag = 'scoped memory for tpu_custom_call.1']
    #allocation9 [shape = 'u8[1024]{0}', space=vmem, size = 0x400, scoped, tag = 'output window, operand 0, single buffered']
    %11 = vsyncpa [#allocation5], 0
    %12 = vsyncpa [#allocation8], 0
    %13 = vsyncpa [#allocation6], 0
    // Predicated region
    $region2: #{tpu_custom_call.1} parent=1 // pred_check
      _
    $region3: #{tpu_custom_call.1} parent=1 // pred_check_branch
      %15 = sbr.rel (0) target = $region5
    $region4: #{tpu_custom_call.1} parent=1 // pred_region
      %17 = vsyncadd [#allocation5], 0
      %s18 = sshll.u32 %s0, 4
      %s19 = int_to_ptr.hbm [resolvable:$true] %s18
      %s20 = sshll.u32 [#allocation4], 4
      %s21 = int_to_ptr.vmem [resolvable:$true] %s20
      %26 = dma.hbm_to_vmem [thread:$0]  %s19, 128, %s21, [#allocation5], 64, 64, 4
    $region5: #{tpu_custom_call.1} parent=1 // pred_fallthru
      _
    // Predicated region
    $region6: #{tpu_custom_call.1} parent=1 // pred_check
      _
    $region7: #{tpu_custom_call.1} parent=1 // pred_check_branch
      %28 = sbr.rel (0) target = $region9
    $region8: #{tpu_custom_call.1} parent=1 // pred_region
      _
    $region9: #{tpu_custom_call.1} parent=1 // pred_fallthru
      _
    // Predicated region
    $region10: #{tpu_custom_call.1} parent=1 // pred_check
      _
    $region11: #{tpu_custom_call.1} parent=1 // pred_check_branch
      %30 = sbr.rel (0) target = $region13
    $region12: #{tpu_custom_call.1} parent=1 // pred_region
      _
    $region13: #{tpu_custom_call.1} parent=1 // pred_fallthru
      _
    // Predicated region
    $region14: #{tpu_custom_call.1} parent=1 // pred_check
      _
    $region15: #{tpu_custom_call.1} parent=1 // pred_check_branch
      %32 = sbr.rel (0) target = $region17
    $region16: #{tpu_custom_call.1} parent=1 // pred_region
      _
    $region17: #{tpu_custom_call.1} parent=1 // pred_fallthru
      _
    // Predicated region
    $region18: #{tpu_custom_call.1} parent=1 // pred_check
      _
    $region19: #{tpu_custom_call.1} parent=1 // pred_check_branch
      %34 = sbr.rel (0) target = $region21
    $region20: #{tpu_custom_call.1} parent=1 // pred_region
      %36 = vsyncadd [#allocation8], 0
      %s37 = sshll.u32 %s4, 4
      %s38 = int_to_ptr.hbm [resolvable:$true] %s37
      %s39 = sshll.u32 [#allocation7], 4
      %s40 = int_to_ptr.vmem [resolvable:$true] %s39
      %45 = dma.hbm_to_vmem [thread:$0]  %s38, 256, %s40, [#allocation8], 64, 64, 4
    $region21: #{tpu_custom_call.1} parent=1 // pred_fallthru
      _
    // Predicated region
    $region22: #{tpu_custom_call.1} parent=1 // pred_check
      _
    $region23: #{tpu_custom_call.1} parent=1 // pred_check_branch
      %47 = sbr.rel (0) target = $region25
    $region24: #{tpu_custom_call.1} parent=1 // pred_region
      _
    $region25: #{tpu_custom_call.1} parent=1 // pred_fallthru
      _
    // Predicated region
    $region26: #{tpu_custom_call.1} parent=1 // pred_check
      _
    $region27: #{tpu_custom_call.1} parent=1 // pred_check_branch
      %49 = sbr.rel (0) target = $region29
    $region28: #{tpu_custom_call.1} parent=1 // pred_region
      %51 = dma.done [#allocation5], 128
    $region29: #{tpu_custom_call.1} parent=1 // pred_fallthru
      _
    // Predicated region
    $region30: #{tpu_custom_call.1} parent=1 // pred_check
      _
    $region31: #{tpu_custom_call.1} parent=1 // pred_check_branch
      %53 = sbr.rel (0) target = $region33
    $region32: #{tpu_custom_call.1} parent=1 // pred_region
      %55 = dma.done [#allocation8], 256
    $region33: #{tpu_custom_call.1} parent=1 // pred_fallthru
      _
    %p57 = scmp.eq.s32.totalorder 0, 0
    // Predicated region
    $region34: #{tpu_custom_call.1} parent=1 // pred_check
      %p58 = pneg %p57
    $region35: #{tpu_custom_call.1} parent=1 // pred_check_branch
      %60 = sbr.rel (%p58) target = $region37
    $region36: #{tpu_custom_call.1} parent=1 // pred_region
      %vm61 = vcmask 254976
      %62 = vst.msk [vmem:[#allocation2] sm:$0x3] %vm61, 0.0
      %vm63 = vcmask 1024
      %64 = vst.msk [vmem:[#allocation3] sm:$0x3] %vm63, 0.0
    $region37: #{tpu_custom_call.1} parent=1 // pred_fallthru
      _
    %v65 = vld [vmem:[%s1] sm:$0xff]
    %v66 = vld [vmem:[%s1 + $0x8] sm:$0xff]
    %v67 = vld [vmem:[#allocation4] sm:$0xf]
    %v68 = vld [vmem:[#allocation4 + $0x4] sm:$0xf]
    %vm69 = vcmp.gt.f32.partialorder %v65, 0.0
    %vm70 = vcmp.gt.f32.partialorder %v66, 0.0
    %v71 = vsel %vm69, 1, 0
    %v72 = vsel %vm70, 1, 0
    %73 = vset.pattern.permute.xlu0 0
    %74 = vperm.xlu0 %73, %v71
    %v75 = vpop.permute.xlu0 %74
    %76 = vset.pattern.permute.xlu0 0
    %77 = vperm.xlu0 %76, %v72
    %v78 = vpop.permute.xlu0 %77
    %vm79 = vcmp.eq.s32.totalorder %v75, 1
    %vm80 = vcmp.eq.s32.totalorder %v78, 1
    %vm81 = vmpackc.low %vm79, %vm79
    %vm82 = vmpackc.low %vm80, %vm80
    %v83 = vsel %vm81, %v67, 0
    %v84 = vsel %vm82, %v68, 0
    %v85 = vpack.c.bf16 %v65, %v65
    %v86 = vpack.c.bf16 %v66, %v66
    %88 = vset.pattern.permute.xlu0 0
    %89 = vperm.xlu0 %88, %v85
    %v90 = vpop.permute.xlu0 %89
    %v93 = vunpack.c.l.s4 839922192
    %v94 = vunpack.c.0.s8 %v93
    %v95 = vperm.slane %v90, %v94
    %97 = vset.pattern.permute.xlu0 0
    %98 = vperm.xlu0 %97, %v86
    %v99 = vpop.permute.xlu0 %98
    %v102 = vunpack.c.l.s4 839922192
    %v103 = vunpack.c.0.s8 %v102
    %v104 = vperm.slane %v99, %v103
    %v105 = vunpack.c.l.bf16 %v83
    %v106 = vunpack.c.l.bf16 %v84
    %v107 = vunpack.c.l.bf16 %v95
    %v108 = vunpack.c.l.bf16 %v104
    %v109 = vmul.f32 %v105, %v107
    %v110 = vmul.f32 %v106, %v108
    %v111 = vpack.c.bf16 %v109, %v109
    %v112 = vpack.c.bf16 %v110, %v110
    %v113 = vunpack.c.l.bf16 %v111
    %v114 = vunpack.c.l.bf16 %v112
    %vm115 = vcmask 261120
    %v116 = vsel %vm115, %v113, 0.0
    %v117 = vrot.slane %v116, 4
    %v118 = vadd.f32 %v116, %v117
    %v119 = vrot.slane %v118, 2
    %v120 = vadd.f32 %v118, %v119
    %v121 = vrot.slane %v120, 1
    %v122 = vadd.f32 %v120, %v121
    %v123 = vsel %vm115, %v114, 0.0
    %v124 = vrot.slane %v123, 4
    %v125 = vadd.f32 %v123, %v124
    %v126 = vrot.slane %v125, 2
    %v127 = vadd.f32 %v125, %v126
    %v128 = vrot.slane %v127, 1
    %v129 = vadd.f32 %v127, %v128
    %vm130 = vcmask 7168
    %v131 = vsel %vm130, %v65, 0.0
    %v132 = vrot.slane %v131, 4
    %v133 = vadd.f32 %v131, %v132
    %v134 = vrot.slane %v133, 2
    %v135 = vadd.f32 %v133, %v134
    %v136 = vrot.slane %v135, 1
    %v137 = vadd.f32 %v135, %v136
    %v138 = vsel %vm130, %v66, 0.0
    %v139 = vrot.slane %v138, 4
    %v140 = vadd.f32 %v138, %v139
    %v141 = vrot.slane %v140, 2
    %v142 = vadd.f32 %v140, %v141
    %v143 = vrot.slane %v142, 1
    %v144 = vadd.f32 %v142, %v143
    %v145 = vld [vmem:[#allocation2] sm:$0x3]
    %vm148 = vcmask 1041409
    %v149 = vsel %vm148, %v129, %v122
    %v151 = vadd.f32 %v145, %v149
    %vm152 = vcmask 254976
    %153 = vst.msk [vmem:[#allocation2] sm:$0x3] %vm152, %v151
    %v154 = vld [vmem:[#allocation3] sm:$0x3]
    %v157 = vsel %vm148, %v144, %v137
    %v159 = vadd.f32 %v154, %v157
    %vm160 = vcmask 1024
    %161 = vst.msk [vmem:[#allocation3] sm:$0x3] %vm160, %v159
    // Predicated region
    $region38: #{tpu_custom_call.1} parent=1 // pred_check
      %p162 = pneg %p57
    $region39: #{tpu_custom_call.1} parent=1 // pred_check_branch
      %164 = sbr.rel (%p162) target = $region41
    $region40: #{tpu_custom_call.1} parent=1 // pred_region
      %v165 = vld [vmem:[#allocation3] sm:$0x3]
      %v166 = vmax.f32 %v165, 1.0
      %v167 = vld [vmem:[#allocation2] sm:$0x3]
      %v168 = vrcp.pop %v166
      %v169 = vmul.f32 %v166, %v168
      %v170 = vsub.f32 1.0, %v169
      %v171 = vmul.f32 %v168, %v170
      %v172 = vadd.f32 %v168, %v171
      %vm173 = vweird.f32 %v166
      %vm174 = vweird.f32 %v168
      %vm175 = vmor %vm173, %vm174
      %v176 = vsel %vm175, %v168, %v172
      %v177 = vand.u32 2147483647, %v166
      %vm178 = vcmp.eq.f32.partialorder %v177, 8.507059e+37
      %v179 = vand.u32 %v166, 2147483648
      %v180 = vor.u32 1.1754944e-38, %v179
      %v181 = vsel %vm178, %v180, %v176
      %183 = vset.pattern.permute.xlu0 0
      %184 = vperm.xlu0 %183, %v181
      %v185 = vpop.permute.xlu0 %184
      %v187 = vmul.f32 %v167, %v185
      %v188 = vpack.c.bf16 %v187, %v187
      %v189 = vld [vmem:[%s2] sm:$0xf]
      %v190 = vld [vmem:[%s2 + $0x4] sm:$0xf]
      %v191 = vld [vmem:[%s2 + $0x8] sm:$0xf]
      %v192 = vld [vmem:[%s2 + $0xc] sm:$0xf]
      %v193 = vld [vmem:[%s3] sm:$0x1]
      %v195 = vperm.slane %v193, 0
      %v201 = vunpack.c.l.b16 %v189
      %v202 = vunpack.c.l.b16 %v190
      %v203 = vunpack.c.l.b16 %v191
      %v204 = vunpack.c.l.b16 %v192
      %v205 = vpack.c.b16 %v202, %v201
      %v206 = vpack.c.b16 %v204, %v203
      %v210 = vsel %vm115, %v188, 0
      %212 = vmatpush.bf16.msra.mxu0 0
      %213 = vmatpush.bf16.msra.mxu0 0
      %214 = vmatpush.bf16.msra.mxu0 0
      %215 = vmatpush.bf16.msra.mxu0 0
      %216 = vmatpush.bf16.msra.mxu0 0
      %217 = vmatpush.bf16.msra.mxu0 0
      %218 = vmatpush.bf16.msra.mxu0 %v206
      %219 = vmatpush.bf16.msra.mxu0 %v205
      %220 = vmatmul.bf16.gmra.mxu0 %v210
      %v221 = vpop.f32.mrf.mxu0
      %v222 = vadd.f32 %v195, %v221
      %v223 = vpop.f32.mrf.mxu0
      %224 = vdwg.mxu0
      %v225 = vtanh.pop %v222
      %v226 = vpack.c.bf16 %v225, %v225
      %v227 = vld [vmem:[#allocation7] sm:$0xf]
      %v228 = vld [vmem:[#allocation7 + $0x4] sm:$0xf]
      %v229 = vld [vmem:[#allocation7 + $0x8] sm:$0xf]
      %v230 = vld [vmem:[#allocation7 + $0xc] sm:$0xf]
      %v231 = vld [vmem:[%s5] sm:$0x1]
      %v233 = vperm.slane %v231, 0
      %v239 = vunpack.c.l.b16 %v227
      %v240 = vunpack.c.l.b16 %v228
      %v241 = vunpack.c.l.b16 %v229
      %v242 = vunpack.c.l.b16 %v230
      %v243 = vpack.c.b16 %v240, %v239
      %v244 = vpack.c.b16 %v242, %v241
      %v248 = vsel %vm115, %v226, 0
      %250 = vmatpush.bf16.msra.mxu0 0
      %251 = vmatpush.bf16.msra.mxu0 0
      %252 = vmatpush.bf16.msra.mxu0 0
      %253 = vmatpush.bf16.msra.mxu0 0
      %254 = vmatpush.bf16.msra.mxu0 0
      %255 = vmatpush.bf16.msra.mxu0 0
      %256 = vmatpush.bf16.msra.mxu0 %v244
      %257 = vmatpush.bf16.msra.mxu0 %v243
      %258 = vmatmul.bf16.gmra.mxu0 %v248
      %v259 = vpop.f32.mrf.mxu0
      %v260 = vadd.f32 %v233, %v259
      %v261 = vpop.f32.mrf.mxu0
      %262 = vdwg.mxu0
      %v263 = vxor.u32 %v260, 2147483648
      %v264 = vmul.f32 %v263, 1.442695
      %v265 = vpow.pop %v264
      %v266 = vadd.f32 %v265, 1.0
      %v267 = vrcp.pop %v266
      %v268 = vmul.f32 %v266, %v267
      %v269 = vsub.f32 1.0, %v268
      %v270 = vmul.f32 %v267, %v269
      %v271 = vadd.f32 %v267, %v270
      %vm272 = vweird.f32 %v266
      %vm273 = vweird.f32 %v267
      %vm274 = vmor %vm272, %vm273
      %v275 = vsel %vm274, %v267, %v271
      %v276 = vand.u32 2147483647, %v266
      %vm277 = vcmp.eq.f32.partialorder %v276, 8.507059e+37
      %v278 = vand.u32 %v266, 2147483648
      %v279 = vor.u32 1.1754944e-38, %v278
      %v280 = vsel %vm277, %v279, %v275
      %v281 = vmul.f32 1.0, %v280
      %282 = vst [vmem:[#allocation9] sm:$0x3] %v281
    $region41: #{tpu_custom_call.1} parent=1 // pred_fallthru
      _
    // Predicated region
    $region42: #{tpu_custom_call.1} parent=1 // pred_check
      _
    $region43: #{tpu_custom_call.1} parent=1 // pred_check_branch
      %284 = sbr.rel (0) target = $region45
    $region44: #{tpu_custom_call.1} parent=1 // pred_region
      %286 = vsyncadd [#allocation6], 0
      %s288 = sshll.u32 [#allocation9], 4
      %s289 = int_to_ptr.vmem [resolvable:$true] %s288
      %s290 = sshll.u32 %s6, 4
      %s291 = int_to_ptr.hbm [resolvable:$true] %s290
      %293 = dma.vmem_to_hbm [thread:$0]  %s289, 32, %s291, [#allocation6]
    $region45: #{tpu_custom_call.1} parent=1 // pred_fallthru
      _
    // Predicated region
    $region46: #{tpu_custom_call.1} parent=1 // pred_check
      _
    $region47: #{tpu_custom_call.1} parent=1 // pred_check_branch
      %295 = sbr.rel (0) target = $region49
    $region48: #{tpu_custom_call.1} parent=1 // pred_region
      %297 = dma.done [#allocation6], 32
    $region49: #{tpu_custom_call.1} parent=1 // pred_fallthru
      _
    %298 = vsyncpa [#allocation5], 1
    %299 = vsyncpa [#allocation8], 1
    %300 = vsyncpa [#allocation6], 1

</llo_original>
